<compile_context>
chip_gen: v6e
topology: v6e:2x2x1
jax: 0.10.0
libtpu: 0.0.40
codegen_flags: <defaults>
</compile_context>

<pallas_src>
import functools
import math

import jax
import jax.numpy as jnp
from jax.experimental import pallas as pl
from jax.experimental.pallas import tpu as pltpu


# ----------------------------- PE buffer (module __init__) ------------------
def make_pe_buffer(d_model, max_len=5000):
    """Matches the PyTorch buffer exactly (positions 0..max_len-1)."""
    position = jnp.arange(0, max_len, dtype=jnp.float32)[:, None]
    div_term = jnp.exp(jnp.arange(0, d_model, 2, dtype=jnp.float32)
                       * -(math.log(10000.0) / d_model))
    pe = jnp.zeros((max_len, d_model), jnp.float32)
    pe = pe.at[:, 0::2].set(jnp.sin(position * div_term))
    if d_model % 2 == 0:
        pe = pe.at[:, 1::2].set(jnp.cos(position * div_term))
    else:
        pe = pe.at[:, 1::2].set(jnp.cos(position * div_term[:-1]))
    return pe  # [max_len, d_model]


# ----------------------------- Pallas kernel --------------------------------
def _add_pe_kernel(x_ref, pe_ref, o_ref):
    # x_ref: [tb, L, D], pe_ref: [L, D] -> broadcast over batch in-VMEM.
    o_ref[...] = (x_ref[...] + pe_ref[...]).astype(o_ref.dtype)


def _pick_batch_tile(B, L, D, itemsize, vmem_budget=8 * 1024 * 1024):
    """Largest divisor of B whose double-buffered in+out tiles fit the budget."""
    best = 1
    for tb in range(1, B + 1):
        if B % tb:
            continue
        tile_bytes = tb * L * D * itemsize
        if 4 * tile_bytes <= vmem_budget:   # 2 buffers each for input & output
            best = tb
    return best


def positional_encoding_forward(x, pe_buffer):
    """x: [B, L, D]; pe_buffer: [max_len, D] (max_len >= L + 1)."""
    B, L, D = x.shape
    # PyTorch forward slices rows 1 .. L of the buffer.
    pe = pe_buffer[1:L + 1].astype(jnp.float32)                 # [L, D]

    tb = _pick_batch_tile(B, L, D, x.dtype.itemsize)
    grid = (B // tb,)

    return pl.pallas_call(
        _add_pe_kernel,
        out_shape=jax.ShapeDtypeStruct((B, L, D), x.dtype),
        grid=grid,
        in_specs=[pl.BlockSpec((tb, L, D), lambda b: (b, 0, 0)),
                  pl.BlockSpec((L, D), lambda b: (0, 0))],
        out_specs=pl.BlockSpec((tb, L, D), lambda b: (b, 0, 0)),
        compiler_params=pltpu.CompilerParams(
            dimension_semantics=("parallel",),
            vmem_limit_bytes=64 * 1024 * 1024),
    )(x, pe)
    # TODO(synk): nn.Dropout is treated as identity (eval mode); training-mode
    # dropout would use pltpu.prng_seed / pltpu.prng_random_bits masking here.


# ----------------------------- demo / self-check ----------------------------
if __name__ == "__main__":
    B, L, D = 2, 8, 32          # batch, seq_len, d_model
    key = jax.random.PRNGKey(0)
    x = jax.random.normal(key, (B, L, D), jnp.float32)

    pe_buf = make_pe_buffer(D, max_len=5000)

    fwd = jax.jit(positional_encoding_forward)
    out = fwd(x, pe_buf)
    jax.block_until_ready(out)

    ref = x + pe_buf[None, 1:L + 1]
    assert out.shape == (B, L, D) and out.dtype == jnp.float32
    assert jnp.allclose(out, ref, atol=1e-6, rtol=1e-6)
    print("KERNEL_OK")
</pallas_src>

<mosaic_0001>
module attributes {stable_mosaic.version = 11 : i64} {
  func.func @_add_pe_kernel(%arg0: i32, %arg1: memref<2x8x32xf32, #tpu.memory_space<vmem>>, %arg2: memref<8x32xf32, #tpu.memory_space<vmem>>, %arg3: memref<2x8x32xf32, #tpu.memory_space<vmem>>) attributes {dimension_semantics = [#tpu.dimension_semantics<parallel>], iteration_bounds = array<i64: 1>, scalar_prefetch = 0 : i64, scratch_operands = 0 : i64, tpu.core_type = #tpu.core_type<tc>, window_params = [{transform_indices = @transform_0, window_bounds = array<i64: 2, 8, 32>}, {pipeline_mode = #tpu.pipeline_mode<synchronous>, transform_indices = @transform_1, window_bounds = array<i64: 8, 32>}, {transform_indices = @transform_2, window_bounds = array<i64: 2, 8, 32>}]} {
    %c0 = arith.constant 0 : index
    %c0_0 = arith.constant 0 : index
    %c0_1 = arith.constant 0 : index
    %0 = vector.load %arg1[%c0, %c0_0, %c0_1] : memref<2x8x32xf32, #tpu.memory_space<vmem>>, vector<2x8x32xf32>
    %c0_2 = arith.constant 0 : index
    %c0_3 = arith.constant 0 : index
    %1 = vector.load %arg2[%c0_2, %c0_3] : memref<8x32xf32, #tpu.memory_space<vmem>>, vector<8x32xf32>
    %2 = vector.shape_cast %1 : vector<8x32xf32> to vector<1x8x32xf32>
    %3 = vector.broadcast %2 : vector<1x8x32xf32> to vector<2x8x32xf32>
    %4 = arith.addf %0, %3 : vector<2x8x32xf32>
    %c0_4 = arith.constant 0 : index
    %c0_5 = arith.constant 0 : index
    %c0_6 = arith.constant 0 : index
    %5 = vector.load %arg3[%c0_4, %c0_5, %c0_6] : memref<2x8x32xf32, #tpu.memory_space<vmem>>, vector<2x8x32xf32>
    tpu.vector_store %arg3[%c0_4, %c0_5, %c0_6], %4 {strides = array<i32>} : memref<2x8x32xf32, #tpu.memory_space<vmem>>, vector<2x8x32xf32>,
    return
  }
  func.func @transform_0(%arg0: i32) -> (i32, i32, i32) {
    %c0_i32 = arith.constant 0 : i32
    %c0_i32_0 = arith.constant 0 : i32
    %c0_i32_1 = arith.constant 0 : i32
    return %arg0, %c0_i32, %c0_i32_0 : i32, i32, i32
  }
  func.func @transform_1(%arg0: i32) -> (i32, i32) {
    %c0_i32 = arith.constant 0 : i32
    %c0_i32_0 = arith.constant 0 : i32
    %c0_i32_1 = arith.constant 0 : i32
    return %c0_i32, %c0_i32_0 : i32, i32
  }
  func.func @transform_2(%arg0: i32) -> (i32, i32, i32) {
    %c0_i32 = arith.constant 0 : i32
    %c0_i32_0 = arith.constant 0 : i32
    %c0_i32_1 = arith.constant 0 : i32
    return %arg0, %c0_i32, %c0_i32_0 : i32, i32, i32
  }
}

</mosaic_0001>

<llo_original>
// kernel: positional_encoding_forward.1
$region0: #{positional_encoding_forward.1}
  #allocation0 [shape = 'u32[]', space=smem, size = 0x4, offset = 0x4, fixed_abs, tag = 'smem constant byte address 0x4 - core index']
  #allocation1 [shape = 'u32[144,128]{1,0:T(1,128)}', space=vmem, size = 0x12000, scoped, tag = 'internal scratch']
  %s0 = inlined_call_operand.vmem [shape: f32[2,8,32], index: 0, kind: input, shape index: {}]
  %s1 = inlined_call_operand.vmem [shape: f32[8,32], index: 1, kind: input, shape index: {}]
  %s2 = inlined_call_operand.hbm [shape: f32[2,8,32], index: 2, kind: output, shape index: {}]
  %s3 = sld [smem:[#allocation0]]
  $region18: #{positional_encoding_forward.1} parent=0
    _
  %s5 = ssub.s32 1, %s3
  %s6 = scalar_select 0, %s5, %s3
  $region1: #{positional_encoding_forward.1} parent=0
    #allocation2 [shape = 'u8[8192]{0}', space=vmem, size = 0x2000, scoped, tag = 'output window, operand 0, single buffered']
    #allocation3 [shape = 's32[1]{0}', space=sflag, size = 0x4, scoped, tag = 'scoped memory for positional_encoding_forward.1']
    %7 = vsyncpa [#allocation3], 0
    // Predicated region
    $region2: #{positional_encoding_forward.1} parent=1 // pred_check
      _
    $region3: #{positional_encoding_forward.1} parent=1 // pred_check_branch
      %9 = sbr.rel (0) target = $region5
    $region4: #{positional_encoding_forward.1} parent=1 // pred_region
      _
    $region5: #{positional_encoding_forward.1} parent=1 // pred_fallthru
      _
    // Predicated region
    $region6: #{positional_encoding_forward.1} parent=1 // pred_check
      _
    $region7: #{positional_encoding_forward.1} parent=1 // pred_check_branch
      %11 = sbr.rel (0) target = $region9
    $region8: #{positional_encoding_forward.1} parent=1 // pred_region
      _
    $region9: #{positional_encoding_forward.1} parent=1 // pred_fallthru
      _
    %v12 = vld [vmem:[%s0] sm:$0xff]
    %v13 = vld [vmem:[%s0 + $0x8] sm:$0xff]
    %v14 = vld [vmem:[%s1] sm:$0xff]
    %v15 = vadd.f32 %v12, %v14
    %v16 = vadd.f32 %v13, %v14
    %vm17 = vcmask 261120
    %18 = vst.msk [vmem:[#allocation2] sm:$0xff] %vm17, %v15
    %19 = vst.msk [vmem:[#allocation2 + $0x8] sm:$0xff] %vm17, %v16
    // Predicated region
    $region10: #{positional_encoding_forward.1} parent=1 // pred_check
      _
    $region11: #{positional_encoding_forward.1} parent=1 // pred_check_branch
      %21 = sbr.rel (0) target = $region13
    $region12: #{positional_encoding_forward.1} parent=1 // pred_region
      %s23 = ssub.s32 256, 256
      %24 = vsyncadd [#allocation3], %s23
      %s25 = sshll.u32 [#allocation2], 4
      %s26 = int_to_ptr.vmem [resolvable:$true] %s25
      %31 = dma.vmem_to_hbm [thread:$0]  %s26, 256, %s2, [#allocation3], 128, 128, 8
    $region13: #{positional_encoding_forward.1} parent=1 // pred_fallthru
      _
    // Predicated region
    $region14: #{positional_encoding_forward.1} parent=1 // pred_check
      _
    $region15: #{positional_encoding_forward.1} parent=1 // pred_check_branch
      %33 = sbr.rel (0) target = $region17
    $region16: #{positional_encoding_forward.1} parent=1 // pred_region
      %34 = dma.done [#allocation3], 256
    $region17: #{positional_encoding_forward.1} parent=1 // pred_fallthru
      _
    %35 = vsyncpa [#allocation3], 1

</llo_original>
